<compile_context>
chip_gen: v5e
topology: v5e:2x2
jax: 0.10.0
libtpu: 0.0.40
codegen_flags: <defaults>
</compile_context>

<pallas_src>
import functools

import jax
import jax.numpy as jnp
from jax.experimental import pallas as pl
from jax.experimental.pallas import tpu as pltpu

NEG_SLOPE = 0.01  # nn.LeakyReLU default negative_slope


def _leaky_relu(x):
    return jnp.where(x >= 0.0, x, NEG_SLOPE * x)


def _mlp_kernel(x_ref, w_ref, b_ref, out_ref, *, dims, w_offsets):
    """One row-tile of the MLP: x -> 3x (Linear + LeakyReLU) -> Linear -> sigmoid."""
    e, h1, h2, h3 = dims
    o1, o2, o3, o4 = w_offsets
    f32 = jnp.float32

    x = x_ref[...].astype(f32)                                      # (TB, E)

    def hidden_layer(h, w_off, rows, cols, b_row):
        z = jnp.dot(h, w_ref[w_off:w_off + rows, :cols],
                    preferred_element_type=f32)
        z = z + b_ref[b_row:b_row + 1, :cols]                       # bias broadcast
        # nn.Dropout is identity in inference mode -> nothing to emit here.
        return _leaky_relu(z)

    h = hidden_layer(x, o1, e, h1, 0)                               # (TB, E//2)
    h = hidden_layer(h, o2, h1, h2, 1)                              # (TB, E//4)
    h = hidden_layer(h, o3, h2, h3, 2)                              # (TB, E//6)

    # final Linear(E//6, 1, bias=False)
    logit = jnp.dot(h, w_ref[o4:o4 + h3, :1], preferred_element_type=f32)  # (TB, 1)

    # sigmoid via EUP: exp + approx reciprocal (separate VLIW slot)
    out_ref[...] = pl.reciprocal(1.0 + jnp.exp(-logit),
                                 approx=True).astype(out_ref.dtype)


def _round_up(x, m):
    return ((x + m - 1) // m) * m


def pack_params(weights, biases):
    """Pack (in, out)-layout weights into one slab and biases into another.

    Row offsets are rounded up to multiples of 8 so every in-kernel row slice
    is sublane-tile aligned.  Padding is zero-filled (never read by the kernel).
    """
    max_cols = max(int(w.shape[1]) for w in weights)
    offsets, total = [], 0
    for w in weights:
        offsets.append(total)
        total += _round_up(int(w.shape[0]), 8)
    w_slab = jnp.zeros((total, max_cols), jnp.float32)
    for off, w in zip(offsets, weights):
        w_slab = w_slab.at[off:off + w.shape[0], :w.shape[1]].set(w)
    b_slab = jnp.zeros((len(biases), max_cols), jnp.float32)
    for i, b in enumerate(biases):
        b_slab = b_slab.at[i, :b.shape[0]].set(b)
    return w_slab, b_slab, tuple(offsets)


def mlp_forward(x, w_slab, b_slab, *, dims, w_offsets, row_tile=256):
    """Pallas forward pass. x: (batch, embedding_size) -> (batch, 1)."""
    b, e = x.shape
    assert e == dims[0]
    tb = b if b <= row_tile else row_tile
    assert b % tb == 0, "batch must be a multiple of the row tile"

    kernel = functools.partial(_mlp_kernel, dims=dims, w_offsets=w_offsets)

    return pl.pallas_call(
        kernel,
        out_shape=jax.ShapeDtypeStruct((b, 1), jnp.float32),
        grid_spec=pltpu.PrefetchScalarGridSpec(
            num_scalar_prefetch=0,
            grid=(b // tb,),
            in_specs=[
                pl.BlockSpec((tb, e), lambda i: (i, 0)),           # row tile of x
                pl.BlockSpec(w_slab.shape, lambda i: (0, 0)),      # resident weights
                pl.BlockSpec(b_slab.shape, lambda i: (0, 0)),      # resident biases
            ],
            out_specs=pl.BlockSpec((tb, 1), lambda i: (i, 0)),
        ),
        compiler_params=pltpu.CompilerParams(
            dimension_semantics=("parallel",)),  # v7x: shard row tiles across TCs
    )(x, w_slab, b_slab)


def init_params(key, embedding_size):
    """Deterministic init matching the PyTorch module (xavier_uniform_, bias=0)."""
    e = embedding_size
    h1, h2, h3 = e // 2, e // 4, e // 6
    ks = jax.random.split(key, 4)

    def xavier(k, fan_in, fan_out):
        bound = (6.0 / (fan_in + fan_out)) ** 0.5
        return jax.random.uniform(k, (fan_in, fan_out), jnp.float32, -bound, bound)

    weights = [xavier(ks[0], e, h1), xavier(ks[1], h1, h2),
               xavier(ks[2], h2, h3), xavier(ks[3], h3, 1)]
    biases = [jnp.zeros((h1,), jnp.float32), jnp.zeros((h2,), jnp.float32),
              jnp.zeros((h3,), jnp.float32)]          # nn.init.constant_(bias, 0)
    dims = (e, h1, h2, h3)
    return weights, biases, dims


def mlp_reference(x, weights, biases):
    """Pure-JAX reference for correctness checking."""
    h = x
    for w, b in zip(weights[:3], biases):
        h = _leaky_relu(jnp.dot(h, w, precision=jax.lax.Precision.HIGHEST) + b)
    return jax.nn.sigmoid(jnp.dot(h, weights[3],
                                  precision=jax.lax.Precision.HIGHEST))


if __name__ == "__main__":
    embedding_size, batch = 48, 8        # hidden chain: 48 -> 24 -> 12 -> 8 -> 1

    key = jax.random.PRNGKey(0)
    k_x, k_p = jax.random.split(key)
    x = jax.random.normal(k_x, (batch, embedding_size), jnp.float32)

    weights, biases, dims = init_params(k_p, embedding_size)
    w_slab, b_slab, w_offsets = pack_params(weights, biases)   # one-time packing

    out = mlp_forward(x, w_slab, b_slab, dims=dims, w_offsets=w_offsets)
    out = jax.block_until_ready(out)

    ref = mlp_reference(x, weights, biases)
    assert out.shape == (batch, 1)
    assert bool(jnp.all(jnp.isfinite(out)))
    assert bool(jnp.allclose(out, ref, atol=1e-2, rtol=1e-2))
    print("KERNEL_OK")
</pallas_src>

<mosaic_0001>
module attributes {stable_mosaic.version = 11 : i64} {
  func.func @_mlp_kernel(%arg0: i32, %arg1: memref<8x48xf32, #tpu.memory_space<vmem>>, %arg2: memref<96x24xf32, #tpu.memory_space<vmem>>, %arg3: memref<3x24xf32, #tpu.memory_space<vmem>>, %arg4: memref<8x1xf32, #tpu.memory_space<vmem>>) attributes {dimension_semantics = [#tpu.dimension_semantics<parallel>], iteration_bounds = array<i64: 1>, scalar_prefetch = 0 : i64, scratch_operands = 0 : i64, tpu.core_type = #tpu.core_type<tc>, window_params = [{transform_indices = @transform_0, window_bounds = array<i64: 8, 48>}, {pipeline_mode = #tpu.pipeline_mode<synchronous>, transform_indices = @transform_1, window_bounds = array<i64: 96, 24>}, {pipeline_mode = #tpu.pipeline_mode<synchronous>, transform_indices = @transform_2, window_bounds = array<i64: 3, 24>}, {transform_indices = @transform_3, window_bounds = array<i64: 8, 1>}]} {
    %c0 = arith.constant 0 : index
    %c0_0 = arith.constant 0 : index
    %0 = vector.load %arg1[%c0, %c0_0] : memref<8x48xf32, #tpu.memory_space<vmem>>, vector<8x48xf32>
    %c0_1 = arith.constant 0 : index
    %c0_2 = arith.constant 0 : index
    %1 = vector.load %arg2[%c0_1, %c0_2] : memref<96x24xf32, #tpu.memory_space<vmem>>, vector<48x24xf32>
    %cst = arith.constant dense<0.000000e+00> : vector<8x24xf32>
    %2 = tpu.matmul %0, %1, %cst {dimension_numbers = #tpu.dot_dimension_numbers<[1], [0], [0], [1], [0, 0, 1, 1], [], []>} : vector<8x48xf32>, vector<48x24xf32>, vector<8x24xf32> -> vector<8x24xf32>
    %c0_3 = arith.constant 0 : index
    %c0_4 = arith.constant 0 : index
    %3 = vector.load %arg3[%c0_3, %c0_4] : memref<3x24xf32, #tpu.memory_space<vmem>>, vector<1x24xf32>
    %4 = vector.broadcast %3 : vector<1x24xf32> to vector<8x24xf32>
    %5 = arith.addf %2, %4 : vector<8x24xf32>
    %cst_5 = arith.constant 0.000000e+00 : f32
    %6 = vector.broadcast %cst_5 : f32 to vector<8x24xf32>
    %7 = arith.cmpf oge, %5, %6 : vector<8x24xf32>
    %cst_6 = arith.constant 0.00999999977 : f32
    %8 = vector.broadcast %cst_6 : f32 to vector<8x24xf32>
    %9 = arith.mulf %8, %5 : vector<8x24xf32>
    %10 = arith.select %7, %5, %9 : vector<8x24xi1>, vector<8x24xf32>
    %c48 = arith.constant 48 : index
    %c0_7 = arith.constant 0 : index
    %11 = vector.load %arg2[%c48, %c0_7] : memref<96x24xf32, #tpu.memory_space<vmem>>, vector<24x12xf32>
    %cst_8 = arith.constant dense<0.000000e+00> : vector<8x12xf32>
    %12 = tpu.matmul %10, %11, %cst_8 {dimension_numbers = #tpu.dot_dimension_numbers<[1], [0], [0], [1], [0, 0, 1, 1], [], []>} : vector<8x24xf32>, vector<24x12xf32>, vector<8x12xf32> -> vector<8x12xf32>
    %c1 = arith.constant 1 : index
    %c0_9 = arith.constant 0 : index
    %13 = vector.load %arg3[%c1, %c0_9] : memref<3x24xf32, #tpu.memory_space<vmem>>, vector<1x12xf32>
    %14 = vector.broadcast %13 : vector<1x12xf32> to vector<8x12xf32>
    %15 = arith.addf %12, %14 : vector<8x12xf32>
    %cst_10 = arith.constant 0.000000e+00 : f32
    %16 = vector.broadcast %cst_10 : f32 to vector<8x12xf32>
    %17 = arith.cmpf oge, %15, %16 : vector<8x12xf32>
    %cst_11 = arith.constant 0.00999999977 : f32
    %18 = vector.broadcast %cst_11 : f32 to vector<8x12xf32>
    %19 = arith.mulf %18, %15 : vector<8x12xf32>
    %20 = arith.select %17, %15, %19 : vector<8x12xi1>, vector<8x12xf32>
    %c72 = arith.constant 72 : index
    %c0_12 = arith.constant 0 : index
    %21 = vector.load %arg2[%c72, %c0_12] : memref<96x24xf32, #tpu.memory_space<vmem>>, vector<12x8xf32>
    %cst_13 = arith.constant dense<0.000000e+00> : vector<8x8xf32>
    %22 = tpu.matmul %20, %21, %cst_13 {dimension_numbers = #tpu.dot_dimension_numbers<[1], [0], [0], [1], [0, 0, 1, 1], [], []>} : vector<8x12xf32>, vector<12x8xf32>, vector<8x8xf32> -> vector<8x8xf32>
    %c2 = arith.constant 2 : index
    %c0_14 = arith.constant 0 : index
    %23 = vector.load %arg3[%c2, %c0_14] : memref<3x24xf32, #tpu.memory_space<vmem>>, vector<1x8xf32>
    %24 = vector.broadcast %23 : vector<1x8xf32> to vector<8x8xf32>
    %25 = arith.addf %22, %24 : vector<8x8xf32>
    %cst_15 = arith.constant 0.000000e+00 : f32
    %26 = vector.broadcast %cst_15 : f32 to vector<8x8xf32>
    %27 = arith.cmpf oge, %25, %26 : vector<8x8xf32>
    %cst_16 = arith.constant 0.00999999977 : f32
    %28 = vector.broadcast %cst_16 : f32 to vector<8x8xf32>
    %29 = arith.mulf %28, %25 : vector<8x8xf32>
    %30 = arith.select %27, %25, %29 : vector<8x8xi1>, vector<8x8xf32>
    %c88 = arith.constant 88 : index
    %c0_17 = arith.constant 0 : index
    %31 = vector.load %arg2[%c88, %c0_17] : memref<96x24xf32, #tpu.memory_space<vmem>>, vector<8x1xf32>
    %cst_18 = arith.constant dense<0.000000e+00> : vector<8x1xf32>
    %32 = tpu.matmul %30, %31, %cst_18 {dimension_numbers = #tpu.dot_dimension_numbers<[1], [0], [0], [1], [0, 0, 1, 1], [], []>} : vector<8x8xf32>, vector<8x1xf32>, vector<8x1xf32> -> vector<8x1xf32>
    %cst_19 = arith.constant 0.000000e+00 : f32
    %33 = vector.broadcast %cst_19 : f32 to vector<8x1xf32>
    %34 = arith.subf %33, %32 : vector<8x1xf32>
    %35 = math.exp %34 : vector<8x1xf32>
    %cst_20 = arith.constant 1.000000e+00 : f32
    %36 = vector.broadcast %cst_20 : f32 to vector<8x1xf32>
    %37 = arith.addf %36, %35 : vector<8x1xf32>
    %38 = tpu.reciprocal %37 {approx = true} : vector<8x1xf32> -> vector<8x1xf32>
    %c0_21 = arith.constant 0 : index
    %c0_22 = arith.constant 0 : index
    %39 = vector.load %arg4[%c0_21, %c0_22] : memref<8x1xf32, #tpu.memory_space<vmem>>, vector<8x1xf32>
    tpu.vector_store %arg4[%c0_21, %c0_22], %38 {strides = array<i32>} : memref<8x1xf32, #tpu.memory_space<vmem>>, vector<8x1xf32>,
    return
  }
  func.func @transform_0(%arg0: i32) -> (i32, i32) {
    %c0_i32 = arith.constant 0 : i32
    %c0_i32_0 = arith.constant 0 : i32
    return %arg0, %c0_i32 : i32, i32
  }
  func.func @transform_1(%arg0: i32) -> (i32, i32) {
    %c0_i32 = arith.constant 0 : i32
    %c0_i32_0 = arith.constant 0 : i32
    %c0_i32_1 = arith.constant 0 : i32
    return %c0_i32, %c0_i32_0 : i32, i32
  }
  func.func @transform_2(%arg0: i32) -> (i32, i32) {
    %c0_i32 = arith.constant 0 : i32
    %c0_i32_0 = arith.constant 0 : i32
    %c0_i32_1 = arith.constant 0 : i32
    return %c0_i32, %c0_i32_0 : i32, i32
  }
  func.func @transform_3(%arg0: i32) -> (i32, i32) {
    %c0_i32 = arith.constant 0 : i32
    %c0_i32_0 = arith.constant 0 : i32
    return %arg0, %c0_i32 : i32, i32
  }
}

</mosaic_0001>

<llo_original>
// kernel: tpu_custom_call.1
$region0: #{tpu_custom_call.1}
  #allocation0 [shape = 'u32[]', space=smem, size = 0x4, offset = 0x4, fixed_abs, tag = 'smem constant byte address 0x4 - core index']
  #allocation1 [shape = 'u32[72,128]{1,0:T(1,128)}', space=vmem, size = 0x9000, scoped, tag = 'internal scratch']
  %s0 = inlined_call_operand.vmem [shape: f32[8,48], index: 0, kind: input, shape index: {}]
  %s1 = inlined_call_operand.vmem [shape: f32[96,24], index: 1, kind: input, shape index: {}]
  %s2 = inlined_call_operand.vmem [shape: f32[3,24], index: 2, kind: input, shape index: {}]
  %s3 = inlined_call_operand.vmem [shape: f32[8,1], index: 3, kind: output, shape index: {}]
  %s4 = sld [smem:[#allocation0]]
  $region22: #{tpu_custom_call.1} parent=0
    _
  %s6 = ssub.s32 1, %s4
  %s7 = scalar_select 0, %s6, %s4
  // Predicated region
  $region2: #{tpu_custom_call.1} parent=0 // pred_check
    _
  $region3: #{tpu_custom_call.1} parent=0 // pred_check_branch
    %9 = sbr.rel (0) target = $region5
  $region4: #{tpu_custom_call.1} parent=0 // pred_region
    _
  $region5: #{tpu_custom_call.1} parent=0 // pred_fallthru
    _
  // Predicated region
  $region6: #{tpu_custom_call.1} parent=0 // pred_check
    _
  $region7: #{tpu_custom_call.1} parent=0 // pred_check_branch
    %11 = sbr.rel (0) target = $region9
  $region8: #{tpu_custom_call.1} parent=0 // pred_region
    _
  $region9: #{tpu_custom_call.1} parent=0 // pred_fallthru
    _
  // Predicated region
  $region10: #{tpu_custom_call.1} parent=0 // pred_check
    _
  $region11: #{tpu_custom_call.1} parent=0 // pred_check_branch
    %13 = sbr.rel (0) target = $region13
  $region12: #{tpu_custom_call.1} parent=0 // pred_region
    _
  $region13: #{tpu_custom_call.1} parent=0 // pred_fallthru
    _
  %v14 = vld [vmem:[%s0] sm:$0xff]
  %v15 = vld [vmem:[%s1] sm:$0xff]
  %v16 = vld [vmem:[%s1 + $0x8] sm:$0xff]
  %v17 = vld [vmem:[%s1 + $0x10] sm:$0xff]
  %v18 = vld [vmem:[%s1 + $0x18] sm:$0xff]
  %v19 = vld [vmem:[%s1 + $0x20] sm:$0xff]
  %v20 = vld [vmem:[%s1 + $0x28] sm:$0xff]
  %v21 = vld [vmem:[%s2] sm:$0x1]
  %v22 = vperm.slane %v21, 0
  %vm23 = vcmask 392192
  %v25 = vsel %vm23, %v14, 0
  %27 = vmatpush.msra.mxu0 0.0
  %28 = vmatpush.msra.mxu0 0.0
  %29 = vmatpush.msra.mxu0 0.0
  %30 = vmatpush.msra.mxu0 0.0
  %31 = vmatpush.msra.mxu0 0.0
  %32 = vmatpush.msra.mxu0 0.0
  %33 = vmatpush.msra.mxu0 0.0
  %34 = vmatpush.msra.mxu0 0.0
  %35 = vmatpush.msra.mxu0 0.0
  %36 = vmatpush.msra.mxu0 0.0
  %37 = vmatpush.msra.mxu0 %v20
  %38 = vmatpush.msra.mxu0 %v19
  %39 = vmatpush.msra.mxu0 %v18
  %40 = vmatpush.msra.mxu0 %v17
  %41 = vmatpush.msra.mxu0 %v16
  %42 = vmatpush.msra.mxu0 %v15
  %43 = vmatmul.f32.gmra.mxu0 %v25
  %v44 = vpop.f32.mrf.mxu0
  %v45 = vadd.f32 %v22, %v44
  %46 = vdwg.mxu0
  %vm47 = vcmp.ge.f32.partialorder %v45, 0.0
  %v48 = vmul.f32 %v45, 0.01
  %v49 = vsel %vm47, %v45, %v48
  %v50 = vld [vmem:[%s1 + $0x30] sm:$0xff]
  %v51 = vld [vmem:[%s1 + $0x38] sm:$0xff]
  %v52 = vld [vmem:[%s1 + $0x40] sm:$0xff]
  %v53 = vld [vmem:[%s2 + $0x1] sm:$0x1]
  %v54 = vperm.slane %v53, 0
  %vm55 = vcmask 195584
  %v57 = vsel %vm55, %v49, 0
  %59 = vmatpush.msra.mxu0 0.0
  %60 = vmatpush.msra.mxu0 0.0
  %61 = vmatpush.msra.mxu0 0.0
  %62 = vmatpush.msra.mxu0 0.0
  %63 = vmatpush.msra.mxu0 0.0
  %64 = vmatpush.msra.mxu0 0.0
  %65 = vmatpush.msra.mxu0 0.0
  %66 = vmatpush.msra.mxu0 0.0
  %67 = vmatpush.msra.mxu0 0.0
  %68 = vmatpush.msra.mxu0 0.0
  %69 = vmatpush.msra.mxu0 0.0
  %70 = vmatpush.msra.mxu0 0.0
  %71 = vmatpush.msra.mxu0 0.0
  %72 = vmatpush.msra.mxu0 %v52
  %73 = vmatpush.msra.mxu0 %v51
  %74 = vmatpush.msra.mxu0 %v50
  %75 = vmatmul.f32.gmra.mxu0 %v57
  %v76 = vpop.f32.mrf.mxu0
  %v77 = vadd.f32 %v54, %v76
  %78 = vdwg.mxu0
  %vm79 = vcmp.ge.f32.partialorder %v77, 0.0
  %v80 = vmul.f32 %v77, 0.01
  %v81 = vsel %vm79, %v77, %v80
  %v82 = vld [vmem:[%s1 + $0x48] sm:$0xff]
  %v83 = vld [vmem:[%s1 + $0x50] sm:$0xf]
  %v84 = vld [vmem:[%s2 + $0x2] sm:$0x1]
  %v85 = vperm.slane %v84, 0
  %vm86 = vcmask 97280
  %v88 = vsel %vm86, %v81, 0
  %vm90 = vcmask 1043456
  %v92 = vsel %vm90, %v83, 0
  %94 = vmatpush.msra.mxu0 0.0
  %95 = vmatpush.msra.mxu0 0.0
  %96 = vmatpush.msra.mxu0 0.0
  %97 = vmatpush.msra.mxu0 0.0
  %98 = vmatpush.msra.mxu0 0.0
  %99 = vmatpush.msra.mxu0 0.0
  %100 = vmatpush.msra.mxu0 0.0
  %101 = vmatpush.msra.mxu0 0.0
  %102 = vmatpush.msra.mxu0 0.0
  %103 = vmatpush.msra.mxu0 0.0
  %104 = vmatpush.msra.mxu0 0.0
  %105 = vmatpush.msra.mxu0 0.0
  %106 = vmatpush.msra.mxu0 0.0
  %107 = vmatpush.msra.mxu0 0.0
  %108 = vmatpush.msra.mxu0 %v92
  %109 = vmatpush.msra.mxu0 %v82
  %110 = vmatmul.f32.gmra.mxu0 %v88
  %v111 = vpop.f32.mrf.mxu0
  %v112 = vadd.f32 %v85, %v111
  %113 = vdwg.mxu0
  %vm114 = vcmp.ge.f32.partialorder %v112, 0.0
  %v115 = vmul.f32 %v112, 0.01
  %v116 = vsel %vm114, %v112, %v115
  %v117 = vld [vmem:[%s1 + $0x58] sm:$0xff]
  %vm118 = vcmask 64512
  %v120 = vsel %vm118, %v116, 0
  %122 = vmatpush.msra.mxu0 0.0
  %123 = vmatpush.msra.mxu0 0.0
  %124 = vmatpush.msra.mxu0 0.0
  %125 = vmatpush.msra.mxu0 0.0
  %126 = vmatpush.msra.mxu0 0.0
  %127 = vmatpush.msra.mxu0 0.0
  %128 = vmatpush.msra.mxu0 0.0
  %129 = vmatpush.msra.mxu0 0.0
  %130 = vmatpush.msra.mxu0 0.0
  %131 = vmatpush.msra.mxu0 0.0
  %132 = vmatpush.msra.mxu0 0.0
  %133 = vmatpush.msra.mxu0 0.0
  %134 = vmatpush.msra.mxu0 0.0
  %135 = vmatpush.msra.mxu0 0.0
  %136 = vmatpush.msra.mxu0 0.0
  %137 = vmatpush.msra.mxu0 %v117
  %138 = vmatmul.f32.gmra.mxu0 %v120
  %v139 = vpop.f32.mrf.mxu0
  %v140 = vadd.f32 0.0, %v139
  %141 = vdwg.mxu0
  %v142 = vsub.f32 0.0, %v140
  %v143 = vmul.f32 %v142, 1.442695
  %v144 = vpow.pop %v143
  %v145 = vadd.f32 %v144, 1.0
  %v146 = vrcp.pop %v145
  %vm147 = vcmask 7168
  %148 = vst.msk [vmem:[%s3] sm:$0xff] %vm147, %v146
  // Predicated region
  $region14: #{tpu_custom_call.1} parent=0 // pred_check
    _
  $region15: #{tpu_custom_call.1} parent=0 // pred_check_branch
    %150 = sbr.rel (0) target = $region17
  $region16: #{tpu_custom_call.1} parent=0 // pred_region
    _
  $region17: #{tpu_custom_call.1} parent=0 // pred_fallthru
    _
  // Predicated region
  $region18: #{tpu_custom_call.1} parent=0 // pred_check
    _
  $region19: #{tpu_custom_call.1} parent=0 // pred_check_branch
    %152 = sbr.rel (0) target = $region21
  $region20: #{tpu_custom_call.1} parent=0 // pred_region
    _
  $region21: #{tpu_custom_call.1} parent=0 // pred_fallthru
    _

</llo_original>
